<compile_context>
chip_gen: v5e
topology: v5e:2x2
jax: 0.10.0
libtpu: 0.0.40
codegen_flags: <defaults>
</compile_context>

<pallas_src>
import functools

import jax
import jax.numpy as jnp
from jax import lax
from jax.experimental import pallas as pl
from jax.experimental.pallas import tpu as pltpu

K_SIZE = 4        # all convs in this block use 4x4 kernels
NEG_SLOPE = 0.2   # LeakyReLU slope
BN_EPS = 1e-5     # nn.BatchNorm2d default


# ----------------------------- Pallas kernels --------------------------------

def _tap_matmul_kernel(a_ref, b_ref, o_ref, *, act_in, act_out):
    """(Co, K) x (K, tm) matmul; output tile is lane-dense (tm on lanes)."""
    a = a_ref[0]                                   # (Co, K)  weights
    b = b_ref[0]                                   # (K, tm)  patches
    if act_in == "leaky_relu":                     # fused input activation
        b = jnp.where(b >= 0, b, NEG_SLOPE * b)    # (0 is a fixed point -> padding safe)
    acc = jnp.dot(a, b, preferred_element_type=jnp.float32)
    if act_out == "relu":                          # fused output activation
        acc = jnp.maximum(acc, 0.0)
    o_ref[0] = acc


def tap_matmul(a_stack, b_stack, *, act_in=None, act_out=None, tm=512):
    """Batched lane-dense matmul: (P, Co, K) @ (P, K, M) -> (P, Co, M) f32.

    M (= N*H*W pixels) sits on the lane axis and is tiled by `tm` (multiple of
    128).  Both grid axes are 'parallel' so v7x can shard across TensorCores.
    """
    P, Co, K = a_stack.shape
    _, _, M = b_stack.shape
    assert M % 128 == 0, M
    tm = min(tm, M)
    while M % tm:
        tm -= 128
    kernel = functools.partial(_tap_matmul_kernel, act_in=act_in, act_out=act_out)
    return pl.pallas_call(
        kernel,
        out_shape=jax.ShapeDtypeStruct((P, Co, M), jnp.float32),
        grid_spec=pltpu.PrefetchScalarGridSpec(
            num_scalar_prefetch=0,
            grid=(P, M // tm),
            in_specs=[
                pl.BlockSpec((1, Co, K), lambda p, i: (p, 0, 0)),
                pl.BlockSpec((1, K, tm), lambda p, i: (p, 0, i)),
            ],
            out_specs=pl.BlockSpec((1, Co, tm), lambda p, i: (p, 0, i)),
        ),
        compiler_params=pltpu.CompilerParams(
            dimension_semantics=("parallel", "parallel")),
    )(a_stack, b_stack)


def _bn_concat_kernel(x_ref, u_ref, o_ref, *, eps):
    """Fused LeakyReLU(skip) + train-mode BatchNorm normalize + channel concat."""
    x = x_ref[...]                                       # (ct, M) raw input slab
    o_ref[0] = jnp.where(x >= 0, x, NEG_SLOPE * x)       # skip branch = leaky_relu(x)
    u = u_ref[...]                                       # (ct, M) up-conv output slab
    mean = jnp.mean(u, axis=1, keepdims=True)
    var = jnp.mean(jnp.square(u - mean), axis=1, keepdims=True)  # biased var (train mode)
    o_ref[1] = (u - mean) * lax.rsqrt(var + eps)         # fresh BN: weight=1, bias=0


def bn_concat_pallas(x_slab, u_slab, eps=BN_EPS):
    """x_slab, u_slab: (C, N*H*W) -> (2C, N*H*W): rows [0,C)=leaky(x), [C,2C)=BN(u)."""
    assert x_slab.shape == u_slab.shape   # innermost block: Cin == Cout
    C, M = u_slab.shape
    ct = 8 if C % 8 == 0 else C           # per-channel stats -> channel tiling is exact
    out = pl.pallas_call(
        functools.partial(_bn_concat_kernel, eps=eps),
        out_shape=jax.ShapeDtypeStruct((2, C, M), jnp.float32),
        grid_spec=pltpu.PrefetchScalarGridSpec(
            num_scalar_prefetch=0,
            grid=(C // ct,),
            in_specs=[
                pl.BlockSpec((ct, M), lambda i: (i, 0)),
                pl.BlockSpec((ct, M), lambda i: (i, 0)),
            ],
            out_specs=pl.BlockSpec((2, ct, M), lambda i: (0, i, 0)),
        ),
        compiler_params=pltpu.CompilerParams(dimension_semantics=("parallel",)),
    )(x_slab, u_slab)
    return out.reshape(2 * C, M)


# ------------------------------- forward --------------------------------------

def unet_innermost_block_forward(x, w_down, w_up):
    """x: (N, Cin, H, W); w_down: (Cmid, Cin, 4, 4); w_up: (Cmid, Cout, 4, 4)."""
    N, Cin, H, W = x.shape
    Cmid = w_down.shape[0]
    Cout = w_up.shape[1]
    Ho, Wo = H // 2, W // 2
    M = N * Ho * Wo

    # channel-major slab layout: pixels (N*H*W) on the lane axis everywhere.
    xc = x.transpose(1, 0, 2, 3)                                    # (Cin, N, H, W)

    # ---- down: Conv2d(Cin->Cmid, k=4, s=2, p=1, bias=False) -------------------
    # im2col in transposed (K, M) layout so the matmul output is (Cmid, M).
    xp = jnp.pad(xc, ((0, 0), (0, 0), (1, 1), (1, 1)))
    taps = [xp[:, :, kh:kh + 2 * Ho:2, kw:kw + 2 * Wo:2]
            for kh in range(K_SIZE) for kw in range(K_SIZE)]
    p_down = jnp.stack(taps, axis=1).reshape(Cin * K_SIZE * K_SIZE, M)
    w_d = w_down.reshape(Cmid, Cin * K_SIZE * K_SIZE)
    # LeakyReLU fused on the patches, the up-path ReLU fused on the output.
    r = tap_matmul(w_d[None], p_down[None],
                   act_in="leaky_relu", act_out="relu")[0]          # (Cmid, M)

    # ---- up: ConvTranspose2d(Cmid->Cout, k=4, s=2, p=1, bias=False) -----------
    # Phase decomposition: output pixel (2i+pr, 2j+ps) only sees kernel rows/cols
    # of parity (1-pr, 1-ps) -> 4 independent stride-1 2x2 convs, no dilated zeros.
    rp = jnp.pad(r.reshape(Cmid, N, Ho, Wo), ((0, 0), (0, 0), (1, 1), (1, 1)))
    a_ph, p_ph = [], []
    for pr in range(2):
        for ps in range(2):
            t = [rp[:, :, pr + dh:pr + dh + Ho, ps + dw:ps + dw + Wo]
                 for dh in range(2) for dw in range(2)]
            p_ph.append(jnp.stack(t, axis=1).reshape(Cmid * 4, M))
            wt = [w_up[:, :, 3 - pr - 2 * dh, 3 - ps - 2 * dw]      # (Cmid, Cout)
                  for dh in range(2) for dw in range(2)]
            a_ph.append(jnp.stack(wt, axis=0).transpose(2, 1, 0).reshape(Cout, Cmid * 4))
    u_ph = tap_matmul(jnp.stack(a_ph), jnp.stack(p_ph))             # (4, Cout, M)
    u = (u_ph.reshape(2, 2, Cout, N, Ho, Wo)                        # interleave phases:
             .transpose(2, 3, 4, 0, 5, 1)                           # (c,n,i,pr,j,ps)
             .reshape(Cout, N * H * W))                             # -> (Cout, N*H*W)

    # ---- BatchNorm2d(Cout) (train stats) + skip concat, single fused pass -----
    out_slab = bn_concat_pallas(xc.reshape(Cin, N * H * W), u)      # (Cin+Cout, N*H*W)
    return out_slab.reshape(Cin + Cout, N, H, W).transpose(1, 0, 2, 3)


# ------------------------------- reference -------------------------------------

def reference_forward(x, w_down, w_up):
    a = jnp.where(x >= 0, x, 0.2 * x)
    d = lax.conv_general_dilated(a, w_down, (2, 2), ((1, 1), (1, 1)),
                                 dimension_numbers=("NCHW", "OIHW", "NCHW"))
    r = jnp.maximum(d, 0.0)
    w_conv = jnp.flip(w_up, axis=(2, 3)).transpose(1, 0, 2, 3)
    u = lax.conv_general_dilated(r, w_conv, (1, 1), ((2, 2), (2, 2)),
                                 lhs_dilation=(2, 2),
                                 dimension_numbers=("NCHW", "OIHW", "NCHW"))
    mean = u.mean(axis=(0, 2, 3), keepdims=True)
    var = ((u - mean) ** 2).mean(axis=(0, 2, 3), keepdims=True)
    y = (u - mean) / jnp.sqrt(var + 1e-5)
    return jnp.concatenate([a, y], axis=1)


if __name__ == "__main__":
    # 卷积层外过滤器数量=4, 卷积层内过滤器数量=8, 输入的通道数=None -> 4
    N, C_OUTER, C_INNER, H, W = 2, 4, 8, 16, 16

    key = jax.random.PRNGKey(0)
    kx, kd, ku = jax.random.split(key, 3)
    x = jax.random.normal(kx, (N, C_OUTER, H, W), jnp.float32)
    w_down = 0.1 * jax.random.normal(kd, (C_INNER, C_OUTER, K_SIZE, K_SIZE), jnp.float32)
    w_up = 0.1 * jax.random.normal(ku, (C_INNER, C_OUTER, K_SIZE, K_SIZE), jnp.float32)

    out = jax.block_until_ready(unet_innermost_block_forward(x, w_down, w_up))
    ref = reference_forward(x, w_down, w_up)

    assert out.shape == (N, 2 * C_OUTER, H, W), out.shape
    assert jnp.allclose(out, ref, atol=1e-4, rtol=1e-4), float(jnp.max(jnp.abs(out - ref)))
    print("KERNEL_OK")
</pallas_src>

<mosaic_0001>
module attributes {stable_mosaic.version = 11 : i64} {
  func.func @_tap_matmul_kernel(%arg0: i32, %arg1: i32, %arg2: memref<1x8x64xf32, #tpu.memory_space<vmem>>, %arg3: memref<1x64x128xf32, #tpu.memory_space<vmem>>, %arg4: memref<1x8x128xf32, #tpu.memory_space<vmem>>) attributes {dimension_semantics = [#tpu.dimension_semantics<parallel>, #tpu.dimension_semantics<parallel>], iteration_bounds = array<i64: 1, 1>, scalar_prefetch = 0 : i64, scratch_operands = 0 : i64, tpu.core_type = #tpu.core_type<tc>, window_params = [{transform_indices = @transform_0, window_bounds = array<i64: 1, 8, 64>}, {transform_indices = @transform_1, window_bounds = array<i64: 1, 64, 128>}, {transform_indices = @transform_2, window_bounds = array<i64: 1, 8, 128>}]} {
    %c0 = arith.constant 0 : index
    %c0_0 = arith.constant 0 : index
    %c0_1 = arith.constant 0 : index
    %0 = vector.load %arg2[%c0, %c0_0, %c0_1] : memref<1x8x64xf32, #tpu.memory_space<vmem>>, vector<1x8x64xf32>
    %1 = vector.shape_cast %0 : vector<1x8x64xf32> to vector<8x64xf32>
    %c0_2 = arith.constant 0 : index
    %c0_3 = arith.constant 0 : index
    %c0_4 = arith.constant 0 : index
    %2 = vector.load %arg3[%c0_2, %c0_3, %c0_4] : memref<1x64x128xf32, #tpu.memory_space<vmem>>, vector<1x64x128xf32>
    %3 = vector.shape_cast %2 : vector<1x64x128xf32> to vector<64x128xf32>
    %cst = arith.constant 0.000000e+00 : f32
    %4 = vector.broadcast %cst : f32 to vector<64x128xf32>
    %5 = arith.cmpf oge, %3, %4 : vector<64x128xf32>
    %cst_5 = arith.constant 2.000000e-01 : f32
    %6 = vector.broadcast %cst_5 : f32 to vector<64x128xf32>
    %7 = arith.mulf %6, %3 : vector<64x128xf32>
    %8 = arith.select %5, %3, %7 : vector<64x128xi1>, vector<64x128xf32>
    %cst_6 = arith.constant dense<0.000000e+00> : vector<8x128xf32>
    %9 = tpu.matmul %1, %8, %cst_6 {dimension_numbers = #tpu.dot_dimension_numbers<[1], [0], [0], [1], [0, 0, 1, 1], [], []>} : vector<8x64xf32>, vector<64x128xf32>, vector<8x128xf32> -> vector<8x128xf32>
    %cst_7 = arith.constant 0.000000e+00 : f32
    %10 = vector.broadcast %cst_7 : f32 to vector<8x128xf32>
    %11 = arith.maximumf %9, %10 : vector<8x128xf32>
    %c0_8 = arith.constant 0 : index
    %c0_9 = arith.constant 0 : index
    %c0_10 = arith.constant 0 : index
    %12 = vector.load %arg4[%c0_8, %c0_9, %c0_10] : memref<1x8x128xf32, #tpu.memory_space<vmem>>, vector<1x8x128xf32>
    %13 = vector.shape_cast %12 : vector<1x8x128xf32> to vector<8x128xf32>
    %14 = vector.shape_cast %11 : vector<8x128xf32> to vector<1x8x128xf32>
    tpu.vector_store %arg4[%c0_8, %c0_9, %c0_10], %14 {strides = array<i32>} : memref<1x8x128xf32, #tpu.memory_space<vmem>>, vector<1x8x128xf32>,
    return
  }
  func.func @transform_0(%arg0: i32, %arg1: i32) -> (i32, i32, i32) {
    %c0_i32 = arith.constant 0 : i32
    %c0_i32_0 = arith.constant 0 : i32
    %c0_i32_1 = arith.constant 0 : i32
    return %arg0, %c0_i32, %c0_i32_0 : i32, i32, i32
  }
  func.func @transform_1(%arg0: i32, %arg1: i32) -> (i32, i32, i32) {
    %c0_i32 = arith.constant 0 : i32
    %c0_i32_0 = arith.constant 0 : i32
    return %arg0, %c0_i32, %arg1 : i32, i32, i32
  }
  func.func @transform_2(%arg0: i32, %arg1: i32) -> (i32, i32, i32) {
    %c0_i32 = arith.constant 0 : i32
    %c0_i32_0 = arith.constant 0 : i32
    return %arg0, %c0_i32, %arg1 : i32, i32, i32
  }
}

</mosaic_0001>

<llo_original>
// kernel: tpu_custom_call.1
$region0: #{tpu_custom_call.1}
  #allocation0 [shape = 'u32[]', space=smem, size = 0x4, offset = 0x4, fixed_abs, tag = 'smem constant byte address 0x4 - core index']
  #allocation1 [shape = 'u32[72,128]{1,0:T(1,128)}', space=vmem, size = 0x9000, scoped, tag = 'internal scratch']
  %s0 = inlined_call_operand.hbm [shape: f32[1,8,64], index: 0, kind: input, shape index: {}]
  %s1 = inlined_call_operand.hbm [shape: f32[1,64,128], index: 1, kind: input, shape index: {}]
  %s2 = inlined_call_operand.hbm [shape: f32[1,8,128], index: 2, kind: output, shape index: {}]
  %s3 = sld [smem:[#allocation0]]
  $region26: #{tpu_custom_call.1} parent=0
    _
  %s5 = ssub.s32 1, %s3
  %s6 = scalar_select 0, %s5, %s3
  $region1: #{tpu_custom_call.1} parent=0
    #allocation2 [shape = 'u8[4096]{0}', space=vmem, size = 0x1000, scoped, tag = 'input window, operand 0, single buffered']
    #allocation3 [shape = 's32[1]{0}', space=sflag, size = 0x4, scoped, tag = 'scoped memory for tpu_custom_call.1']
    #allocation4 [shape = 's32[1]{0}', space=sflag, size = 0x4, scoped, tag = 'scoped memory for tpu_custom_call.1']
    #allocation5 [shape = 'u8[32768]{0}', space=vmem, size = 0x8000, scoped, tag = 'input window, operand 1, single buffered']
    #allocation6 [shape = 's32[1]{0}', space=sflag, size = 0x4, scoped, tag = 'scoped memory for tpu_custom_call.1']
    #allocation7 [shape = 'u8[4096]{0}', space=vmem, size = 0x1000, scoped, tag = 'output window, operand 0, single buffered']
    %7 = vsyncpa [#allocation3], 0
    %8 = vsyncpa [#allocation6], 0
    %9 = vsyncpa [#allocation4], 0
    // Predicated region
    $region2: #{tpu_custom_call.1} parent=1 // pred_check
      _
    $region3: #{tpu_custom_call.1} parent=1 // pred_check_branch
      %11 = sbr.rel (0) target = $region5
    $region4: #{tpu_custom_call.1} parent=1 // pred_region
      %13 = vsyncadd [#allocation3], 0
      %s15 = sshll.u32 %s0, 4
      %s16 = int_to_ptr.hbm [resolvable:$true] %s15
      %s17 = sshll.u32 [#allocation2], 4
      %s18 = int_to_ptr.vmem [resolvable:$true] %s17
      %20 = dma.hbm_to_vmem [thread:$0]  %s16, 128, %s18, [#allocation3]
    $region5: #{tpu_custom_call.1} parent=1 // pred_fallthru
      _
    // Predicated region
    $region6: #{tpu_custom_call.1} parent=1 // pred_check
      _
    $region7: #{tpu_custom_call.1} parent=1 // pred_check_branch
      %22 = sbr.rel (0) target = $region9
    $region8: #{tpu_custom_call.1} parent=1 // pred_region
      %24 = vsyncadd [#allocation6], 0
      %s25 = sshll.u32 %s1, 4
      %s26 = int_to_ptr.hbm [resolvable:$true] %s25
      %s27 = sshll.u32 [#allocation5], 4
      %s28 = int_to_ptr.vmem [resolvable:$true] %s27
      %33 = dma.hbm_to_vmem [thread:$0]  %s26, 1024, %s28, [#allocation6], 128, 128, 8
    $region9: #{tpu_custom_call.1} parent=1 // pred_fallthru
      _
    // Predicated region
    $region10: #{tpu_custom_call.1} parent=1 // pred_check
      _
    $region11: #{tpu_custom_call.1} parent=1 // pred_check_branch
      %35 = sbr.rel (0) target = $region13
    $region12: #{tpu_custom_call.1} parent=1 // pred_region
      %37 = dma.done [#allocation3], 128
    $region13: #{tpu_custom_call.1} parent=1 // pred_fallthru
      _
    // Predicated region
    $region14: #{tpu_custom_call.1} parent=1 // pred_check
      _
    $region15: #{tpu_custom_call.1} parent=1 // pred_check_branch
      %39 = sbr.rel (0) target = $region17
    $region16: #{tpu_custom_call.1} parent=1 // pred_region
      %41 = dma.done [#allocation6], 1024
    $region17: #{tpu_custom_call.1} parent=1 // pred_fallthru
      _
    %v42 = vld [vmem:[#allocation2] sm:$0xff]
    %v43 = vld [vmem:[#allocation5] sm:$0xff]
    %v44 = vld [vmem:[#allocation5 + $0x8] sm:$0xff]
    %v45 = vld [vmem:[#allocation5 + $0x10] sm:$0xff]
    %v46 = vld [vmem:[#allocation5 + $0x18] sm:$0xff]
    %v47 = vld [vmem:[#allocation5 + $0x20] sm:$0xff]
    %v48 = vld [vmem:[#allocation5 + $0x28] sm:$0xff]
    %v49 = vld [vmem:[#allocation5 + $0x30] sm:$0xff]
    %v50 = vld [vmem:[#allocation5 + $0x38] sm:$0xff]
    %vm51 = vcmp.ge.f32.partialorder %v43, 0.0
    %vm52 = vcmp.ge.f32.partialorder %v44, 0.0
    %vm53 = vcmp.ge.f32.partialorder %v45, 0.0
    %vm54 = vcmp.ge.f32.partialorder %v46, 0.0
    %vm55 = vcmp.ge.f32.partialorder %v47, 0.0
    %vm56 = vcmp.ge.f32.partialorder %v48, 0.0
    %vm57 = vcmp.ge.f32.partialorder %v49, 0.0
    %vm58 = vcmp.ge.f32.partialorder %v50, 0.0
    %v59 = vmul.f32 %v43, 0.2
    %v60 = vmul.f32 %v44, 0.2
    %v61 = vmul.f32 %v45, 0.2
    %v62 = vmul.f32 %v46, 0.2
    %v63 = vmul.f32 %v47, 0.2
    %v64 = vmul.f32 %v48, 0.2
    %v65 = vmul.f32 %v49, 0.2
    %v66 = vmul.f32 %v50, 0.2
    %v67 = vsel %vm51, %v43, %v59
    %v68 = vsel %vm52, %v44, %v60
    %v69 = vsel %vm53, %v45, %v61
    %v70 = vsel %vm54, %v46, %v62
    %v71 = vsel %vm55, %v47, %v63
    %v72 = vsel %vm56, %v48, %v64
    %v73 = vsel %vm57, %v49, %v65
    %v74 = vsel %vm58, %v50, %v66
    %vm75 = vcmask 523264
    %v77 = vsel %vm75, %v42, 0
    %79 = vmatpush.msra.mxu0 0.0
    %80 = vmatpush.msra.mxu0 0.0
    %81 = vmatpush.msra.mxu0 0.0
    %82 = vmatpush.msra.mxu0 0.0
    %83 = vmatpush.msra.mxu0 0.0
    %84 = vmatpush.msra.mxu0 0.0
    %85 = vmatpush.msra.mxu0 0.0
    %86 = vmatpush.msra.mxu0 0.0
    %87 = vmatpush.msra.mxu0 %v74
    %88 = vmatpush.msra.mxu0 %v73
    %89 = vmatpush.msra.mxu0 %v72
    %90 = vmatpush.msra.mxu0 %v71
    %91 = vmatpush.msra.mxu0 %v70
    %92 = vmatpush.msra.mxu0 %v69
    %93 = vmatpush.msra.mxu0 %v68
    %94 = vmatpush.msra.mxu0 %v67
    %95 = vmatmul.f32.gmra.mxu0 %v77
    %v96 = vpop.f32.mrf.mxu0
    %v97 = vadd.f32 0.0, %v96
    %98 = vdwg.mxu0
    %v99 = vmax.f32 %v97, 0.0
    %100 = vst [vmem:[#allocation7] sm:$0xff] %v99
    // Predicated region
    $region18: #{tpu_custom_call.1} parent=1 // pred_check
      _
    $region19: #{tpu_custom_call.1} parent=1 // pred_check_branch
      %102 = sbr.rel (0) target = $region21
    $region20: #{tpu_custom_call.1} parent=1 // pred_region
      %104 = vsyncadd [#allocation4], 0
      %s106 = sshll.u32 [#allocation7], 4
      %s107 = int_to_ptr.vmem [resolvable:$true] %s106
      %s108 = sshll.u32 %s2, 4
      %s109 = int_to_ptr.hbm [resolvable:$true] %s108
      %111 = dma.vmem_to_hbm [thread:$0]  %s107, 128, %s109, [#allocation4]
    $region21: #{tpu_custom_call.1} parent=1 // pred_fallthru
      _
    // Predicated region
    $region22: #{tpu_custom_call.1} parent=1 // pred_check
      _
    $region23: #{tpu_custom_call.1} parent=1 // pred_check_branch
      %113 = sbr.rel (0) target = $region25
    $region24: #{tpu_custom_call.1} parent=1 // pred_region
      %115 = dma.done [#allocation4], 128
    $region25: #{tpu_custom_call.1} parent=1 // pred_fallthru
      _
    %116 = vsyncpa [#allocation3], 1
    %117 = vsyncpa [#allocation6], 1
    %118 = vsyncpa [#allocation4], 1

</llo_original>
